<compile_context>
chip_gen: v7x
topology: tpu7x:2x2x1
jax: 0.10.0
libtpu: 0.0.40
codegen_flags: <defaults>
</compile_context>

<pallas_src>
import functools

import jax
import jax.numpy as jnp
from jax.experimental import pallas as pl
from jax.experimental.pallas import tpu as pltpu


def _make_pconv_kernel(B_blk, H_out, KH, Lpad, WC):
    BH = B_blk * H_out

    def kernel(x_ref, m_ref, w_ref, b_ref, out_ref, nm_ref):
        # x_ref, m_ref : (B_blk, Hp, Lpad)   zero-padded, lane-dense (w, cin) lanes
        # w_ref        : (KH*Lpad, 2*WC)     banded conv weights | mask-sum columns
        # b_ref        : (1, WC)             bias tiled W_out times along lanes
        # out_ref/nm_ref : (B_blk, H_out, WC)
        m = m_ref[...]
        xm = x_ref[...] * m                    # hoisted: one multiply per block

        # Build a single lane-dense LHS: top rows carry x*m, bottom rows carry m;
        # the KH row-taps are concatenated along K (each piece is Lpad = 128-
        # aligned lanes).  kw and cin are folded into the banded RHS, so there is
        # no per-tap lane slicing, no cross-lane reduction, no tiny matmuls.
        lhs_top = jnp.concatenate(
            [xm[:, kh:kh + H_out, :].reshape(BH, Lpad) for kh in range(KH)],
            axis=-1)
        lhs_bot = jnp.concatenate(
            [m[:, kh:kh + H_out, :].reshape(BH, Lpad) for kh in range(KH)],
            axis=-1)
        lhs = jnp.concatenate([lhs_top, lhs_bot], axis=0)   # (2*BH, KH*Lpad)

        # One MXU push: left WC columns = conv(x*m, W) (valid in the top rows),
        # right WC columns = conv(m, ones) already broadcast over Cout lanes
        # (valid in the bottom rows).
        res = jnp.dot(lhs, w_ref[...], preferred_element_type=jnp.float32)
        conv = res[:BH, :WC]
        msum = res[BH:, WC:]

        # Keep mask-sum and the ==0 test in f32: mask entries and the 0/1 RHS are
        # exact on the MXU, so msum is an exact small integer.
        holes = msum == 0.0
        mask_sum = jnp.where(holes, 1.0, msum)
        out = jnp.where(holes, 0.0, conv / mask_sum + b_ref[...])
        new_mask = jnp.where(holes, 0.0, 1.0)

        out_ref[...] = out.reshape(B_blk, H_out, WC).astype(out_ref.dtype)
        nm_ref[...] = new_mask.reshape(B_blk, H_out, WC).astype(nm_ref.dtype)

    return kernel


def _build_rhs(weight, Wp, W_out, Lpad):
    """Banded RHS: rows = (kh, wi*Cin + cin) zero-padded to Lpad per kh;
    columns = [conv(x*m, W) | mask-sum broadcast over Cout]."""
    KH, KW, Cin, Cout = weight.shape
    WC = W_out * Cout
    wi = jnp.arange(Wp)[:, None]                 # padded input column index
    wo = jnp.arange(W_out)[None, :]              # output column index
    kw = wi - wo                                 # (Wp, W_out)
    valid = (kw >= 0) & (kw < KW)
    kw_safe = jnp.clip(kw, 0, KW - 1)

    w32 = weight.astype(jnp.float32)
    # band[kh, wi, wo, cin, cout] = W[kh, wi-wo, cin, cout] where valid, else 0
    band = jnp.where(valid[None, :, :, None, None], w32[:, kw_safe, :, :], 0.0)
    band = band.transpose(0, 1, 3, 2, 4)         # (KH, Wp, Cin, W_out, Cout)
    rhs_conv = band.reshape(KH, Wp * Cin, WC)

    band_m = jnp.broadcast_to(
        valid[None, :, None, :, None].astype(jnp.float32),
        (KH, Wp, Cin, W_out, Cout))
    rhs_msum = band_m.reshape(KH, Wp * Cin, WC)

    rhs = jnp.concatenate([rhs_conv, rhs_msum], axis=-1)     # (KH, Wp*Cin, 2*WC)
    rhs = jnp.pad(rhs, ((0, 0), (0, Lpad - Wp * Cin), (0, 0)))
    return rhs.reshape(KH * Lpad, 2 * WC)


@functools.partial(
    jax.jit,
    static_argnames=("stride", "padding", "dilation", "groups", "num_blocks"))
def pconv_block(x, mask, weight, bias, *, stride=1, padding=1, dilation=1,
                groups=1, num_blocks=None):
    """Partial-conv block forward.  x, mask: (N, H, W, Cin) NHWC."""
    if stride != 1 or dilation != 1 or groups != 1:
        raise NotImplementedError(
            "pconv_block kernel only implements stride=1, dilation=1, groups=1")
    N, H, W, Cin = x.shape
    KH, KW, Cin_w, Cout = weight.shape
    assert Cin_w == Cin

    Hp, Wp = H + 2 * padding, W + 2 * padding
    H_out, W_out = Hp - KH + 1, Wp - KW + 1
    WC = W_out * Cout
    Lpad = ((Wp * Cin + 127) // 128) * 128       # lane-align the (w, cin) axis

    if num_blocks is None:
        # 2 parallel batch blocks -> both v7x TensorCores are used; on v5e/v6e
        # (single TC) pass num_blocks=1 to fold the whole batch into one matmul.
        num_blocks = 2 if N % 2 == 0 else 1
    assert N % num_blocks == 0
    B_blk = N // num_blocks

    # Zero-pad spatially, flatten (w, cin) into a lane-dense axis, pad to Lpad.
    # TODO(synk): at production image sizes move the zero-padding into the
    # kernel (zero-initialized VMEM scratch) to avoid an extra HBM pass.
    pad_cfg = ((0, 0), (padding, padding), (padding, padding), (0, 0))
    def _prep(a):
        a = jnp.pad(a.astype(jnp.float32), pad_cfg).reshape(N, Hp, Wp * Cin)
        return jnp.pad(a, ((0, 0), (0, 0), (0, Lpad - Wp * Cin)))
    xp, mp = _prep(x), _prep(mask)

    rhs = _build_rhs(weight, Wp, W_out, Lpad)                 # (KH*Lpad, 2*WC)
    bias_dense = jnp.tile(bias.astype(jnp.float32), (W_out,)).reshape(1, WC)

    kernel = _make_pconv_kernel(B_blk, H_out, KH, Lpad, WC)

    out_shape = (
        jax.ShapeDtypeStruct((N, H_out, WC), x.dtype),
        jax.ShapeDtypeStruct((N, H_out, WC), x.dtype),
    )

    # VMEM per grid step here is well under 1 MiB (inputs ~9 KiB each, RHS
    # KH*Lpad*2*WC*4 B ~ 0.4 MiB), comfortably inside the default scoped VMEM
    # limit on v5e/v6e/v7x even with double-buffering.
    out2, nm2 = pl.pallas_call(
        kernel,
        out_shape=out_shape,
        grid_spec=pltpu.PrefetchScalarGridSpec(
            num_scalar_prefetch=0,
            grid=(num_blocks,),
            in_specs=[
                pl.BlockSpec((B_blk, Hp, Lpad), lambda i: (i, 0, 0)),
                pl.BlockSpec((B_blk, Hp, Lpad), lambda i: (i, 0, 0)),
                pl.BlockSpec((KH * Lpad, 2 * WC), lambda i: (0, 0)),
                pl.BlockSpec((1, WC), lambda i: (0, 0)),
            ],
            out_specs=[
                pl.BlockSpec((B_blk, H_out, WC), lambda i: (i, 0, 0)),
                pl.BlockSpec((B_blk, H_out, WC), lambda i: (i, 0, 0)),
            ],
        ),
        compiler_params=pltpu.CompilerParams(
            dimension_semantics=("parallel",)),
    )(xp, mp, rhs, bias_dense)

    out = out2.reshape(N, H_out, W_out, Cout)
    new_mask = nm2.reshape(N, H_out, W_out, Cout)
    return out, new_mask


def pconv_reference(x, mask, weight, bias, *, padding=1):
    """Pure-JAX reference for correctness checking (NHWC)."""
    dn = ("NHWC", "HWIO", "NHWC")
    pad = [(padding, padding), (padding, padding)]
    conv = jax.lax.conv_general_dilated(
        x * mask, weight, (1, 1), pad, dimension_numbers=dn,
        precision=jax.lax.Precision.HIGHEST,
    )
    out_mask = jax.lax.conv_general_dilated(
        mask, jnp.ones_like(weight), (1, 1), pad, dimension_numbers=dn,
        precision=jax.lax.Precision.HIGHEST,
    )
    holes = out_mask == 0.0
    mask_sum = jnp.where(holes, 1.0, out_mask)
    out = jnp.where(holes, 0.0, conv / mask_sum + bias.reshape(1, 1, 1, -1))
    new_mask = jnp.where(holes, 0.0, 1.0)
    return out, new_mask


if __name__ == "__main__":
    # Module config: in_channels=4, out_channels=8, kernel=3, stride=1,
    # padding=1, dilation=1, groups=1, bias=True.
    N, H, W = 2, 16, 16
    Cin, Cout, K, PAD = 4, 8, 3, 1

    key = jax.random.PRNGKey(0)
    kx, kw, kb, km = jax.random.split(key, 4)

    x = jax.random.normal(kx, (N, H, W, Cin), dtype=jnp.float32)
    # Deterministic parameter init (synthetic; not a checkpoint load).
    weight = 0.1 * jax.random.normal(kw, (K, K, Cin, Cout), dtype=jnp.float32)
    bias = 0.1 * jax.random.normal(kb, (Cout,), dtype=jnp.float32)

    # Binary mask with a solid zero region so some conv windows are full holes.
    mask = jax.random.bernoulli(km, p=0.8, shape=(N, H, W, Cin)).astype(jnp.float32)
    mask = mask.at[:, 4:10, 4:10, :].set(0.0)

    out, new_mask = pconv_block(x, mask, weight, bias, padding=PAD)
    out = jax.block_until_ready(out)
    new_mask = jax.block_until_ready(new_mask)

    ref_out, ref_mask = pconv_reference(x, mask, weight, bias, padding=PAD)
    assert out.shape == (N, H, W, Cout) and new_mask.shape == (N, H, W, Cout)
    assert jnp.allclose(out, ref_out, atol=2e-3, rtol=2e-3), "output mismatch"
    assert jnp.allclose(new_mask, ref_mask, atol=1e-6), "new_mask mismatch"

    print("KERNEL_OK")
</pallas_src>

<mosaic_0001>
module attributes {stable_mosaic.version = 11 : i64} {
  func.func @kernel(%arg0: i32, %arg1: memref<1x18x128xf32, #tpu.memory_space<vmem>>, %arg2: memref<1x18x128xf32, #tpu.memory_space<vmem>>, %arg3: memref<384x256xf32, #tpu.memory_space<vmem>>, %arg4: memref<1x128xf32, #tpu.memory_space<vmem>>, %arg5: memref<1x16x128xf32, #tpu.memory_space<vmem>>, %arg6: memref<1x16x128xf32, #tpu.memory_space<vmem>>) attributes {dimension_semantics = [#tpu.dimension_semantics<parallel>], iteration_bounds = array<i64: 2>, scalar_prefetch = 0 : i64, scratch_operands = 0 : i64, tpu.core_type = #tpu.core_type<tc>, window_params = [{transform_indices = @transform_0, window_bounds = array<i64: 1, 18, 128>}, {transform_indices = @transform_1, window_bounds = array<i64: 1, 18, 128>}, {pipeline_mode = #tpu.pipeline_mode<synchronous>, transform_indices = @transform_2, window_bounds = array<i64: 384, 256>}, {pipeline_mode = #tpu.pipeline_mode<synchronous>, transform_indices = @transform_3, window_bounds = array<i64: 1, 128>}, {transform_indices = @transform_4, window_bounds = array<i64: 1, 16, 128>}, {transform_indices = @transform_5, window_bounds = array<i64: 1, 16, 128>}]} {
    %c0 = arith.constant 0 : index
    %c0_0 = arith.constant 0 : index
    %c0_1 = arith.constant 0 : index
    %0 = vector.load %arg2[%c0, %c0_0, %c0_1] : memref<1x18x128xf32, #tpu.memory_space<vmem>>, vector<1x18x128xf32>
    %c0_2 = arith.constant 0 : index
    %c0_3 = arith.constant 0 : index
    %c0_4 = arith.constant 0 : index
    %1 = vector.load %arg1[%c0_2, %c0_3, %c0_4] : memref<1x18x128xf32, #tpu.memory_space<vmem>>, vector<1x18x128xf32>
    %2 = arith.mulf %1, %0 : vector<1x18x128xf32>
    %3 = vector.extract_strided_slice %2 {offsets = [0, 0, 0], sizes = [1, 16, 128], strides = [1, 1, 1]} : vector<1x18x128xf32> to vector<1x16x128xf32>
    %4 = vector.shape_cast %3 : vector<1x16x128xf32> to vector<16x128xf32>
    %5 = vector.extract_strided_slice %2 {offsets = [0, 1, 0], sizes = [1, 16, 128], strides = [1, 1, 1]} : vector<1x18x128xf32> to vector<1x16x128xf32>
    %6 = vector.shape_cast %5 : vector<1x16x128xf32> to vector<16x128xf32>
    %7 = vector.extract_strided_slice %2 {offsets = [0, 2, 0], sizes = [1, 16, 128], strides = [1, 1, 1]} : vector<1x18x128xf32> to vector<1x16x128xf32>
    %8 = vector.shape_cast %7 : vector<1x16x128xf32> to vector<16x128xf32>
    %9 = tpu.concatenate %4, %6, %8 in 1 : vector<16x128xf32>, vector<16x128xf32>, vector<16x128xf32> -> vector<16x384xf32>
    %10 = vector.extract_strided_slice %0 {offsets = [0, 0, 0], sizes = [1, 16, 128], strides = [1, 1, 1]} : vector<1x18x128xf32> to vector<1x16x128xf32>
    %11 = vector.shape_cast %10 : vector<1x16x128xf32> to vector<16x128xf32>
    %12 = vector.extract_strided_slice %0 {offsets = [0, 1, 0], sizes = [1, 16, 128], strides = [1, 1, 1]} : vector<1x18x128xf32> to vector<1x16x128xf32>
    %13 = vector.shape_cast %12 : vector<1x16x128xf32> to vector<16x128xf32>
    %14 = vector.extract_strided_slice %0 {offsets = [0, 2, 0], sizes = [1, 16, 128], strides = [1, 1, 1]} : vector<1x18x128xf32> to vector<1x16x128xf32>
    %15 = vector.shape_cast %14 : vector<1x16x128xf32> to vector<16x128xf32>
    %16 = tpu.concatenate %11, %13, %15 in 1 : vector<16x128xf32>, vector<16x128xf32>, vector<16x128xf32> -> vector<16x384xf32>
    %17 = tpu.concatenate %9, %16 in 0 : vector<16x384xf32>, vector<16x384xf32> -> vector<32x384xf32>
    %c0_5 = arith.constant 0 : index
    %c0_6 = arith.constant 0 : index
    %18 = vector.load %arg3[%c0_5, %c0_6] : memref<384x256xf32, #tpu.memory_space<vmem>>, vector<384x256xf32>
    %cst = arith.constant dense<0.000000e+00> : vector<32x256xf32>
    %19 = tpu.matmul %17, %18, %cst {dimension_numbers = #tpu.dot_dimension_numbers<[1], [0], [0], [1], [0, 0, 1, 1], [], []>} : vector<32x384xf32>, vector<384x256xf32>, vector<32x256xf32> -> vector<32x256xf32>
    %20 = vector.extract_strided_slice %19 {offsets = [0, 0], sizes = [16, 128], strides = [1, 1]} : vector<32x256xf32> to vector<16x128xf32>
    %21 = vector.extract_strided_slice %19 {offsets = [16, 128], sizes = [16, 128], strides = [1, 1]} : vector<32x256xf32> to vector<16x128xf32>
    %cst_7 = arith.constant 0.000000e+00 : f32
    %22 = vector.broadcast %cst_7 : f32 to vector<16x128xf32>
    %23 = arith.cmpf oeq, %21, %22 : vector<16x128xf32>
    %cst_8 = arith.constant 1.000000e+00 : f32
    %24 = vector.broadcast %cst_8 : f32 to vector<16x128xf32>
    %25 = arith.select %23, %24, %21 : vector<16x128xi1>, vector<16x128xf32>
    %26 = arith.divf %20, %25 : vector<16x128xf32>
    %c0_9 = arith.constant 0 : index
    %c0_10 = arith.constant 0 : index
    %27 = vector.load %arg4[%c0_9, %c0_10] : memref<1x128xf32, #tpu.memory_space<vmem>>, vector<1x128xf32>
    %28 = vector.broadcast %27 : vector<1x128xf32> to vector<16x128xf32>
    %29 = arith.addf %26, %28 : vector<16x128xf32>
    %cst_11 = arith.constant 0.000000e+00 : f32
    %30 = vector.broadcast %cst_11 : f32 to vector<16x128xf32>
    %31 = arith.select %23, %30, %29 : vector<16x128xi1>, vector<16x128xf32>
    %cst_12 = arith.constant 0.000000e+00 : f32
    %cst_13 = arith.constant 1.000000e+00 : f32
    %32 = vector.broadcast %cst_12 : f32 to vector<16x128xf32>
    %33 = vector.broadcast %cst_13 : f32 to vector<16x128xf32>
    %34 = arith.select %23, %32, %33 : vector<16x128xi1>, vector<16x128xf32>
    %35 = vector.shape_cast %31 : vector<16x128xf32> to vector<1x16x128xf32>
    %c0_14 = arith.constant 0 : index
    %c0_15 = arith.constant 0 : index
    %c0_16 = arith.constant 0 : index
    %36 = vector.load %arg5[%c0_14, %c0_15, %c0_16] : memref<1x16x128xf32, #tpu.memory_space<vmem>>, vector<1x16x128xf32>
    tpu.vector_store %arg5[%c0_14, %c0_15, %c0_16], %35 {strides = array<i32>} : memref<1x16x128xf32, #tpu.memory_space<vmem>>, vector<1x16x128xf32>,
    %37 = vector.shape_cast %34 : vector<16x128xf32> to vector<1x16x128xf32>
    %c0_17 = arith.constant 0 : index
    %c0_18 = arith.constant 0 : index
    %c0_19 = arith.constant 0 : index
    %38 = vector.load %arg6[%c0_17, %c0_18, %c0_19] : memref<1x16x128xf32, #tpu.memory_space<vmem>>, vector<1x16x128xf32>
    tpu.vector_store %arg6[%c0_17, %c0_18, %c0_19], %37 {strides = array<i32>} : memref<1x16x128xf32, #tpu.memory_space<vmem>>, vector<1x16x128xf32>,
    return
  }
  func.func @transform_0(%arg0: i32) -> (i32, i32, i32) {
    %c0_i32 = arith.constant 0 : i32
    %c0_i32_0 = arith.constant 0 : i32
    %c0_i32_1 = arith.constant 0 : i32
    return %arg0, %c0_i32, %c0_i32_0 : i32, i32, i32
  }
  func.func @transform_1(%arg0: i32) -> (i32, i32, i32) {
    %c0_i32 = arith.constant 0 : i32
    %c0_i32_0 = arith.constant 0 : i32
    %c0_i32_1 = arith.constant 0 : i32
    return %arg0, %c0_i32, %c0_i32_0 : i32, i32, i32
  }
  func.func @transform_2(%arg0: i32) -> (i32, i32) {
    %c0_i32 = arith.constant 0 : i32
    %c0_i32_0 = arith.constant 0 : i32
    %c0_i32_1 = arith.constant 0 : i32
    return %c0_i32, %c0_i32_0 : i32, i32
  }
  func.func @transform_3(%arg0: i32) -> (i32, i32) {
    %c0_i32 = arith.constant 0 : i32
    %c0_i32_0 = arith.constant 0 : i32
    %c0_i32_1 = arith.constant 0 : i32
    return %c0_i32, %c0_i32_0 : i32, i32
  }
  func.func @transform_4(%arg0: i32) -> (i32, i32, i32) {
    %c0_i32 = arith.constant 0 : i32
    %c0_i32_0 = arith.constant 0 : i32
    %c0_i32_1 = arith.constant 0 : i32
    return %arg0, %c0_i32, %c0_i32_0 : i32, i32, i32
  }
  func.func @transform_5(%arg0: i32) -> (i32, i32, i32) {
    %c0_i32 = arith.constant 0 : i32
    %c0_i32_0 = arith.constant 0 : i32
    %c0_i32_1 = arith.constant 0 : i32
    return %arg0, %c0_i32, %c0_i32_0 : i32, i32, i32
  }
}

</mosaic_0001>

<llo_original>
// kernel: tile.8
$region0: #{tile.8}
  #allocation0 [shape = 's32[1]{0}', space=sflag, size = 0x4, scoped, tag = 'scoped memory for tile.8']
  %s0 = inlined_call_operand.vmem [shape: f32[8], index: 0, kind: input, shape index: {}]
  %s1 = inlined_call_operand.vmem [shape: f32[16,8], index: 1, kind: output, shape index: {}]
  // Predicated region
  $region2: #{tile.8} parent=0 // pred_check
    _
  $region3: #{tile.8} parent=0 // pred_check_branch
    %3 = sbr.rel (0) target = $region5
  $region4: #{tile.8} parent=0 // pred_region
    _
  $region5: #{tile.8} parent=0 // pred_fallthru
    _
  %v4 = vld [vmem:[%s0] ss:$0 sm:$0xff]
  %5 = vst [vmem:[%s1] sm:$0xff] %v4
  %s6 = scalar_lea.vmem %s1, 8
  %7 = vst [vmem:[%s6] sm:$0xff] %v4

// kernel: tile.9
$region0: #{tile.9}
  %s0 = inlined_call_operand.vmem [shape: f32[16,8], index: 0, kind: input, shape index: {}]
  %s1 = inlined_call_operand.vmem [shape: f32[1,128], index: 1, kind: output, shape index: {}]
  $region1: #{tile.9} parent=0
    #allocation0 [shape = 'u8[4096]{0}', space=vmem, size = 0x1000, scoped, tag = 'scoped mem for output reshape']
    %v2 = vld [vmem:[%s0] sm:$0x1]
    %vm3 = vcmask 64512
    %4 = vst.msk [vmem:[#allocation0] sm:$0x1] %vm3, %v2
    %s5 = scalar_lea.vmem %s0, 15
    %v6 = vld [vmem:[%s5] sm:$0x1]
    %7 = vrot.lane.b32.xlu0 %v6, 120
    %v8 = vpop.permute.xlu0 %7
    %vm9 = vcmask 1048512
    %10 = vst.msk [vmem:[#allocation0] sm:$0x1] %vm9, %v8
    %s11 = scalar_lea.vmem %s0, 14
    %v12 = vld [vmem:[%s11] sm:$0x1]
    %13 = vrot.lane.b32.xlu0 %v12, 112
    %v14 = vpop.permute.xlu0 %13
    %vm15 = vcmask 982912
    %16 = vst.msk [vmem:[#allocation0] sm:$0x1] %vm15, %v14
    %s17 = scalar_lea.vmem %s0, 13
    %v18 = vld [vmem:[%s17] sm:$0x1]
    %19 = vrot.lane.b32.xlu0 %v18, 104
    %v20 = vpop.permute.xlu0 %19
    %vm21 = vcmask 917312
    %22 = vst.msk [vmem:[#allocation0] sm:$0x1] %vm21, %v20
    %s23 = scalar_lea.vmem %s0, 12
    %v24 = vld [vmem:[%s23] sm:$0x1]
    %25 = vrot.lane.b32.xlu0 %v24, 96
    %v26 = vpop.permute.xlu0 %25
    %vm27 = vcmask 851712
    %28 = vst.msk [vmem:[#allocation0] sm:$0x1] %vm27, %v26
    %s29 = scalar_lea.vmem %s0, 11
    %v30 = vld [vmem:[%s29] sm:$0x1]
    %31 = vrot.lane.b32.xlu0 %v30, 88
    %v32 = vpop.permute.xlu0 %31
    %vm33 = vcmask 786112
    %34 = vst.msk [vmem:[#allocation0] sm:$0x1] %vm33, %v32
    %s35 = scalar_lea.vmem %s0, 10
    %v36 = vld [vmem:[%s35] sm:$0x1]
    %37 = vrot.lane.b32.xlu0 %v36, 80
    %v38 = vpop.permute.xlu0 %37
    %vm39 = vcmask 720512
    %40 = vst.msk [vmem:[#allocation0] sm:$0x1] %vm39, %v38
    %s41 = scalar_lea.vmem %s0, 9
    %v42 = vld [vmem:[%s41] sm:$0x1]
    %43 = vrot.lane.b32.xlu0 %v42, 72
    %v44 = vpop.permute.xlu0 %43
    %vm45 = vcmask 654912
    %46 = vst.msk [vmem:[#allocation0] sm:$0x1] %vm45, %v44
    %s47 = scalar_lea.vmem %s0, 8
    %v48 = vld [vmem:[%s47] sm:$0x1]
    %49 = vrot.lane.b32.xlu0 %v48, 64
    %v50 = vpop.permute.xlu0 %49
    %vm51 = vcmask 589312
    %52 = vst.msk [vmem:[#allocation0] sm:$0x1] %vm51, %v50
    %s53 = scalar_lea.vmem %s0, 7
    %v54 = vld [vmem:[%s53] sm:$0x1]
    %55 = vrot.lane.b32.xlu0 %v54, 56
    %v56 = vpop.permute.xlu0 %55
    %vm57 = vcmask 523712
    %58 = vst.msk [vmem:[#allocation0] sm:$0x1] %vm57, %v56
    %s59 = scalar_lea.vmem %s0, 6
    %v60 = vld [vmem:[%s59] sm:$0x1]
    %61 = vrot.lane.b32.xlu0 %v60, 48
    %v62 = vpop.permute.xlu0 %61
    %vm63 = vcmask 458112
    %64 = vst.msk [vmem:[#allocation0] sm:$0x1] %vm63, %v62
    %s65 = scalar_lea.vmem %s0, 5
    %v66 = vld [vmem:[%s65] sm:$0x1]
    %67 = vrot.lane.b32.xlu0 %v66, 40
    %v68 = vpop.permute.xlu0 %67
    %vm69 = vcmask 392512
    %70 = vst.msk [vmem:[#allocation0] sm:$0x1] %vm69, %v68
    %s71 = scalar_lea.vmem %s0, 4
    %v72 = vld [vmem:[%s71] sm:$0x1]
    %73 = vrot.lane.b32.xlu0 %v72, 32
    %v74 = vpop.permute.xlu0 %73
    %vm75 = vcmask 326912
    %76 = vst.msk [vmem:[#allocation0] sm:$0x1] %vm75, %v74
    %s77 = scalar_lea.vmem %s0, 3
    %v78 = vld [vmem:[%s77] sm:$0x1]
    %79 = vrot.lane.b32.xlu0 %v78, 24
    %v80 = vpop.permute.xlu0 %79
    %vm81 = vcmask 261312
    %82 = vst.msk [vmem:[#allocation0] sm:$0x1] %vm81, %v80
    %s83 = scalar_lea.vmem %s0, 2
    %v84 = vld [vmem:[%s83] sm:$0x1]
    %85 = vrot.lane.b32.xlu0 %v84, 16
    %v86 = vpop.permute.xlu0 %85
    %vm87 = vcmask 195712
    %88 = vst.msk [vmem:[#allocation0] sm:$0x1] %vm87, %v86
    %s89 = scalar_lea.vmem %s0, 1
    %v90 = vld [vmem:[%s89] sm:$0x1]
    %91 = vrot.lane.b32.xlu0 %v90, 8
    %v92 = vpop.permute.xlu0 %91
    %vm93 = vcmask 130112
    %94 = vst.msk [vmem:[#allocation0] sm:$0x1] %vm93, %v92
    %s96 = sshllo.u32 0, 1
    %v98 = vld [vmem:[#allocation0] sm:%s96]
    %s99 = sshllo.u32 0, 1
    %100 = vst [vmem:[%s1] sm:%s99] %v98

// kernel: pconv_block.1
$region0: #{pconv_block.1}
  #allocation0 [shape = 'u32[]', space=smem, size = 0x4, offset = 0x4, fixed_abs, tag = 'smem constant byte address 0x4 - core index']
  #allocation1 [shape = 'u32[144,128]{1,0:T(1,128)}', space=vmem, size = 0x12000, scoped, tag = 'internal scratch']
  %s0 = inlined_call_operand.vmem [shape: f32[2,18,128], index: 0, kind: input, shape index: {}]
  %s1 = inlined_call_operand.vmem [shape: f32[2,18,128], index: 1, kind: input, shape index: {}]
  %s2 = inlined_call_operand.vmem [shape: f32[384,256], index: 2, kind: input, shape index: {}]
  %s3 = inlined_call_operand.vmem [shape: f32[1,128], index: 3, kind: input, shape index: {}]
  %s4 = inlined_call_operand.vmem [shape: f32[2,16,128], index: 4, kind: output, shape index: {0}]
  %s5 = inlined_call_operand.vmem [shape: f32[2,16,128], index: 5, kind: output, shape index: {1}]
  %6 = xla_tuple %s4, %s5
  %s7 = sld [smem:[#allocation0]]
  $region57: #{pconv_block.1} parent=0
    _
  %s9 = ssub.s32 1, %s7
  %s10 = scalar_select 0, %s9, %s7
  loop: start=0, step=1, limit=4
  $region2: #{pconv_block.1} parent=0 // loop_pre_header
    _
  $region3: #{pconv_block.1} parent=0 // loop_header
    %s12 = sphi 0, %s16
    %p13 = scmp.ge.s32.totalorder %s12, 4
    %s22 = sphi 0, %s24
    %s25 = sphi 0, %s22
    %s26 = sphi 0, %s25
    %s42 = sphi 0, %s26
    %s48 = sphi 0, %s50
    %s51 = sphi 0, %s48
    %s52 = sphi 0, %s51
    %s68 = sphi 0, %s52
    %s72 = sphi 0, %s72
    %s74 = sphi 0, %s72
    %s75 = sphi 0, %s74
    %s89 = sphi 0, %s75
    %s93 = sphi 0, %s93
    %s95 = sphi 0, %s93
    %s96 = sphi 0, %s95
    %s110 = sphi 0, %s96
    %s116 = sphi 0, %s118
    %s119 = sphi 0, %s116
    %s120 = sphi 0, %s119
    %s136 = sphi 0, %s120
    %s142 = sphi 0, %s144
    %s145 = sphi 0, %s142
    %s146 = sphi 0, %s145
    %s162 = sphi 0, %s146
  $region4: #{pconv_block.1} parent=0 // loop_header_branch
    %15 = sbr.rel (%p13) target = $region8
  $region5: #{pconv_block.1} parent=0 // loop_body
    %s17 = ssub.s32 %s12, 1
    %s18 = ssub.s32 %s12, 2
    %s19 = sadd.s32 %s12, 1
    %s20 = ssub.s32 %s12, %s19
    %p21 = scmp.eq.s32.totalorder %s20, 0
    %s23 = sadd.s32 %s22, 1
    %s24 = scalar_select %p21, %s22, %s23
    %p27 = pneg %p21
    %p28 = scmp.eq.s32.totalorder %s12, 1
    %p29 = por %p27, %p28
    %p30 = scmp.ne.s32.totalorder %s22, %s25
    %p31 = scmp.eq.s32.totalorder %s12, 0
    %p32 = por %p30, %p31
    %p33 = scmp.ne.s32.totalorder %s22, %s25
    %p34 = scmp.eq.s32.totalorder %s17, 1
    %p35 = por %p33, %p34
    %p36 = scmp.ne.s32.totalorder %s25, %s26
    %p37 = scmp.eq.s32.totalorder %s17, 0
    %p38 = por %p36, %p37
    %p39 = scmp.ne.s32.totalorder %s25, %s26
    %p40 = scmp.eq.s32.totalorder %s18, 1
    %p41 = por %p39, %p40
    %p43 = scmp.ne.s32.totalorder %s26, %s42
    %p44 = scmp.eq.s32.totalorder %s18, 0
    %p45 = por %p43, %p44
    %s46 = ssub.s32 %s12, %s19
    %p47 = scmp.eq.s32.totalorder %s46, 0
    %s49 = sadd.s32 %s48, 1
    %s50 = scalar_select %p47, %s48, %s49
    %p53 = pneg %p47
    %p54 = scmp.eq.s32.totalorder %s12, 1
    %p55 = por %p53, %p54
    %p56 = scmp.ne.s32.totalorder %s48, %s51
    %p57 = scmp.eq.s32.totalorder %s12, 0
    %p58 = por %p56, %p57
    %p59 = scmp.ne.s32.totalorder %s48, %s51
    %p60 = scmp.eq.s32.totalorder %s17, 1
    %p61 = por %p59, %p60
    %p62 = scmp.ne.s32.totalorder %s51, %s52
    %p63 = scmp.eq.s32.totalorder %s17, 0
    %p64 = por %p62, %p63
    %p65 = scmp.ne.s32.totalorder %s51, %s52
    %p66 = scmp.eq.s32.totalorder %s18, 1
    %p67 = por %p65, %p66
    %p69 = scmp.ne.s32.totalorder %s52, %s68
    %p70 = scmp.eq.s32.totalorder %s18, 0
    %p71 = por %p69, %p70
    %s73 = sadd.s32 %s72, 1
    %p76 = scmp.eq.s32.totalorder %s12, 1
    %p77 = scmp.ne.s32.totalorder %s72, %s74
    %p78 = scmp.eq.s32.totalorder %s12, 0
    %p79 = por %p77, %p78
    %p80 = scmp.ne.s32.totalorder %s72, %s74
    %p81 = scmp.eq.s32.totalorder %s17, 1
    %p82 = por %p80, %p81
    %p83 = scmp.ne.s32.totalorder %s74, %s75
    %p84 = scmp.eq.s32.totalorder %s17, 0
    %p85 = por %p83, %p84
    %p86 = scmp.ne.s32.totalorder %s74, %s75
    %p87 = scmp.eq.s32.totalorder %s18, 1
    %p88 = por %p86, %p87
    %p90 = scmp.ne.s32.totalorder %s75, %s89
    %p91 = scmp.eq.s32.totalorder %s18, 0
    %p92 = por %p90, %p91
    %s94 = sadd.s32 %s93, 1
    %p97 = scmp.eq.s32.totalorder %s12, 1
    %p98 = scmp.ne.s32.totalorder %s93, %s95
    %p99 = scmp.eq.s32.totalorder %s12, 0
    %p100 = por %p98, %p99
    %p101 = scmp.ne.s32.totalorder %s93, %s95
    %p102 = scmp.eq.s32.totalorder %s17, 1
    %p103 = por %p101, %p102
    %p104 = scmp.ne.s32.totalorder %s95, %s96
    %p105 = scmp.eq.s32.totalorder %s17, 0
    %p106 = por %p104, %p105
    %p107 = scmp.ne.s32.totalorder %s95, %s96
    %p108 = scmp.eq.s32.totalorder %s18, 1
    %p109 = por %p107, %p108
    %p111 = scmp.ne.s32.totalorder %s96, %s110
    %p112 = scmp.eq.s32.totalorder %s18, 0
    %p113 = por %p111, %p112
    %s114 = ssub.s32 %s12, %s19
    %p115 = scmp.eq.s32.totalorder %s114, 0
    %s117 = sadd.s32 %s116, 1
    %s118 = scalar_select %p115, %s116, %s117
    %p121 = pneg %p115
    %p122 = scmp.eq.s32.totalorder %s12, 1
    %p123 = por %p121, %p122
    %p124 = scmp.ne.s32.totalorder %s116, %s119
    %p125 = scmp.eq.s32.totalorder %s12, 0
    %p126 = por %p124, %p125
    %p127 = scmp.ne.s32.totalorder %s116, %s119
    %p128 = scmp.eq.s32.totalorder %s17, 1
    %p129 = por %p127, %p128
    %p130 = scmp.ne.s32.totalorder %s119, %s120
    %p131 = scmp.eq.s32.totalorder %s17, 0
    %p132 = por %p130, %p131
    %p133 = scmp.ne.s32.totalorder %s119, %s120
    %p134 = scmp.eq.s32.totalorder %s18, 1
    %p135 = por %p133, %p134
    %p137 = scmp.ne.s32.totalorder %s120, %s136
    %p138 = scmp.eq.s32.totalorder %s18, 0
    %p139 = por %p137, %p138
    %s140 = ssub.s32 %s12, %s19
    %p141 = scmp.eq.s32.totalorder %s140, 0
    %s143 = sadd.s32 %s142, 1
    %s144 = scalar_select %p141, %s142, %s143
    %p147 = pneg %p141
    %p148 = scmp.eq.s32.totalorder %s12, 1
    %p149 = por %p147, %p148
    %p150 = scmp.ne.s32.totalorder %s142, %s145
    %p151 = scmp.eq.s32.totalorder %s12, 0
    %p152 = por %p150, %p151
    %p153 = scmp.ne.s32.totalorder %s142, %s145
    %p154 = scmp.eq.s32.totalorder %s17, 1
    %p155 = por %p153, %p154
    %p156 = scmp.ne.s32.totalorder %s145, %s146
    %p157 = scmp.eq.s32.totalorder %s17, 0
    %p158 = por %p156, %p157
    %p159 = scmp.ne.s32.totalorder %s145, %s146
    %p160 = scmp.eq.s32.totalorder %s18, 1
    %p161 = por %p159, %p160
    %p163 = scmp.ne.s32.totalorder %s146, %s162
    %p164 = scmp.eq.s32.totalorder %s18, 0
    %p165 = por %p163, %p164
    %p166 = scmp.le.s32.totalorder 1, %s12
    %p167 = scmp.lt.s32.totalorder %s12, 3
    %p168 = pnand %p166, %p167
    %p169 = pneg %p168
    // Predicated region
    $region9: #{pconv_block.1} parent=5 // pred_check
      _
    $region10: #{pconv_block.1} parent=5 // pred_check_branch
      %171 = sbr.rel (%p168) target = $region12
    $region11: #{pconv_block.1} parent=5 // pred_region
      %s172 = ssub.s32 %s12, 1
      // Predicated region
      $region13: #{pconv_block.1} parent=11 // pred_check
        %p173 = pneg %p85
      $region14: #{pconv_block.1} parent=11 // pred_check_branch
        %175 = sbr.rel (%p173) target = $region16
      $region15: #{pconv_block.1} parent=11 // pred_region
        _
      $region16: #{pconv_block.1} parent=11 // pred_fallthru
        _
      // Predicated region
      $region17: #{pconv_block.1} parent=11 // pred_check
        %p176 = pneg %p106
      $region18: #{pconv_block.1} parent=11 // pred_check_branch
        %178 = sbr.rel (%p176) target = $region20
      $region19: #{pconv_block.1} parent=11 // pred_region
        _
      $region20: #{pconv_block.1} parent=11 // pred_fallthru
        _
    $region12: #{pconv_block.1} parent=5 // pred_fallthru
      _
    %p179 = scmp.lt.s32.totalorder %s12, 2
    // Predicated region
    $region21: #{pconv_block.1} parent=5 // pred_check
      %p180 = pneg %p179
    $region22: #{pconv_block.1} parent=5 // pred_check_branch
      %182 = sbr.rel (%p180) target = $region24
    $region23: #{pconv_block.1} parent=5 // pred_region
      // Predicated region
      $region25: #{pconv_block.1} parent=23 // pred_check
        %p183 = pneg %p32
      $region26: #{pconv_block.1} parent=23 // pred_check_branch
        %185 = sbr.rel (%p183) target = $region28
      $region27: #{pconv_block.1} parent=23 // pred_region
        %p186 = scmp.lt.s32.totalorder %s12, 1
        %s187 = scalar_select %p186, %s12, 1
        %s188 = smul.addr %s187, 3
        %s189 = smul.addr %s188, 8
        %s190 = scalar_lea.vmem %s0, %s189
      $region28: #{pconv_block.1} parent=23 // pred_fallthru
        _
      // Predicated region
      $region29: #{pconv_block.1} parent=23 // pred_check
        %p191 = pneg %p58
      $region30: #{pconv_block.1} parent=23 // pred_check_branch
        %193 = sbr.rel (%p191) target = $region32
      $region31: #{pconv_block.1} parent=23 // pred_region
        %p194 = scmp.lt.s32.totalorder %s12, 1
        %s195 = scalar_select %p194, %s12, 1
        %s196 = smul.addr %s195, 3
        %s197 = smul.addr %s196, 8
        %s198 = scalar_lea.vmem %s1, %s197
      $region32: #{pconv_block.1} parent=23 // pred_fallthru
        _
    $region24: #{pconv_block.1} parent=5 // pred_fallthru
      _
    %p199 = scmp.le.s32.totalorder 1, %s12
    %p200 = scmp.lt.s32.totalorder %s12, 3
    %p201 = pnand %p199, %p200
    %p202 = pneg %p201
    // Predicated region
    $region33: #{pconv_block.1} parent=5 // pred_check
      _
    $region34: #{pconv_block.1} parent=5 // pred_check_branch
      %204 = sbr.rel (%p201) target = $region36
    $region35: #{pconv_block.1} parent=5 // pred_region
      %s205 = ssub.s32 %s12, 1
      %p206 = scmp.lt.s32.totalorder %s17, 1
      %s207 = scalar_select %p206, %s17, 1
      %s208 = smul.addr %s207, 3
      %s209 = smul.addr %s208, 8
      %s210 = scalar_lea.vmem %s0, %s209
      %p211 = pneg %p38
      %p212 = pneg %p35
      %p213 = scmp.lt.s32.totalorder %s17, 1
      %s214 = scalar_select %p213, %s17, 1
      %s215 = smul.addr %s214, 3
      %s216 = smul.addr %s215, 8
      %s217 = scalar_lea.vmem %s1, %s216
      %p218 = pneg %p64
      %p219 = pneg %p61
      %p220 = pneg %p85
      %p221 = pneg %p82
      %p222 = pneg %p106
      %p223 = pneg %p103
      %p224 = pneg %p132
      %p225 = pneg %p129
      %p226 = scmp.lt.s32.totalorder %s17, 1
      %s227 = scalar_select %p226, %s17, 1
      %s228 = smul.addr %s227, 2
      %s229 = smul.addr %s228, 8
      %s230 = scalar_lea.vmem %s4, %s229
      %p231 = pneg %p158
      %p232 = pneg %p155
      %p233 = scmp.lt.s32.totalorder %s17, 1
      %s234 = scalar_select %p233, %s17, 1
      %s235 = smul.addr %s234, 2
      %s236 = smul.addr %s235, 8
      %s237 = scalar_lea.vmem %s5, %s236
      %p238 = scmp.lt.s32.totalorder %s17, 1
      %s239 = scalar_select %p238, %s17, 1
      %s240 = smul.addr %s239, 3
      %s241 = smul.addr %s240, 8
      %s242 = scalar_lea.vmem %s0, %s241
      %p243 = scmp.lt.s32.totalorder %s17, 1
      %s244 = scalar_select %p243, %s17, 1
      %s245 = smul.addr %s244, 3
      %s246 = smul.addr %s245, 8
      %s247 = scalar_lea.vmem %s1, %s246
      %p248 = scmp.lt.s32.totalorder %s17, 1
      %s249 = scalar_select %p248, %s17, 1
      %s250 = smul.addr %s249, 2
      %s251 = smul.addr %s250, 8
      %s252 = scalar_lea.vmem %s4, %s251
      %p253 = scmp.lt.s32.totalorder %s17, 1
      %s254 = scalar_select %p253, %s17, 1
      %s255 = smul.addr %s254, 2
      %s256 = smul.addr %s255, 8
      %s257 = scalar_lea.vmem %s5, %s256
      %v258 = vld [vmem:[%s247] sm:$0xff]
      %v259 = vld [vmem:[%s247 + $0x8] sm:$0xff]
      %v260 = vld [vmem:[%s247 + $0x10] sm:$0x3]
      %v261 = vld [vmem:[%s242] sm:$0xff]
      %v262 = vld [vmem:[%s242 + $0x8] sm:$0xff]
      %v263 = vld [vmem:[%s242 + $0x10] sm:$0x3]
      %v264 = vmul.f32 %v261, %v258
      %v265 = vmul.f32 %v262, %v259
      %v266 = vmul.f32 %v263, %v260
      %vm270 = vcmask 1046528
      %v271 = vrot.slane %v264, 1
      %v272 = vrot.slane %v265, 1
      %v273 = vsel %vm270, %v271, %v272
      %v274 = vrot.slane %v266, 1
      %v275 = vsel %vm270, %v272, %v274
      %vm278 = vcmask 1045504
      %v279 = vrot.slane %v264, 2
      %v280 = vrot.slane %v265, 2
      %v281 = vsel %vm278, %v279, %v280
      %v282 = vrot.slane %v266, 2
      %v283 = vsel %vm278, %v280, %v282
      %v289 = vrot.slane %v258, 1
      %v290 = vrot.slane %v259, 1
      %v291 = vsel %vm270, %v289, %v290
      %v292 = vrot.slane %v260, 1
      %v293 = vsel %vm270, %v290, %v292
      %v296 = vrot.slane %v258, 2
      %v297 = vrot.slane %v259, 2
      %v298 = vsel %vm278, %v296, %v297
      %v299 = vrot.slane %v260, 2
      %v300 = vsel %vm278, %v297, %v299
      %v303 = vld [vmem:[%s2] sm:$0xff]
      %v304 = vld [vmem:[%s2 + $0x8] sm:$0xff]
      %v305 = vld [vmem:[%s2 + $0x10] sm:$0xff]
      %v306 = vld [vmem:[%s2 + $0x18] sm:$0xff]
      %v307 = vld [vmem:[%s2 + $0x20] sm:$0xff]
      %v308 = vld [vmem:[%s2 + $0x28] sm:$0xff]
      %v309 = vld [vmem:[%s2 + $0x30] sm:$0xff]
      %v310 = vld [vmem:[%s2 + $0x38] sm:$0xff]
      %v311 = vld [vmem:[%s2 + $0x40] sm:$0xff]
      %v312 = vld [vmem:[%s2 + $0x48] sm:$0xff]
      %v313 = vld [vmem:[%s2 + $0x50] sm:$0xff]
      %v314 = vld [vmem:[%s2 + $0x58] sm:$0xff]
      %v315 = vld [vmem:[%s2 + $0x60] sm:$0xff]
      %v316 = vld [vmem:[%s2 + $0x68] sm:$0xff]
      %v317 = vld [vmem:[%s2 + $0x70] sm:$0xff]
      %v318 = vld [vmem:[%s2 + $0x78] sm:$0xff]
      %v319 = vld [vmem:[%s2 + $0x80] sm:$0xff]
      %v320 = vld [vmem:[%s2 + $0x88] sm:$0xff]
      %v321 = vld [vmem:[%s2 + $0x90] sm:$0xff]
      %v322 = vld [vmem:[%s2 + $0x98] sm:$0xff]
      %v323 = vld [vmem:[%s2 + $0xa0] sm:$0xff]
      %v324 = vld [vmem:[%s2 + $0xa8] sm:$0xff]
      %v325 = vld [vmem:[%s2 + $0xb0] sm:$0xff]
      %v326 = vld [vmem:[%s2 + $0xb8] sm:$0xff]
      %v327 = vld [vmem:[%s2 + $0xc0] sm:$0xff]
      %v328 = vld [vmem:[%s2 + $0xc8] sm:$0xff]
      %v329 = vld [vmem:[%s2 + $0xd0] sm:$0xff]
      %v330 = vld [vmem:[%s2 + $0xd8] sm:$0xff]
      %v331 = vld [vmem:[%s2 + $0xe0] sm:$0xff]
      %v332 = vld [vmem:[%s2 + $0xe8] sm:$0xff]
      %v333 = vld [vmem:[%s2 + $0xf0] sm:$0xff]
      %v334 = vld [vmem:[%s2 + $0xf8] sm:$0xff]
      %v335 = vld [vmem:[%s2 + $0x100] sm:$0xff]
      %v336 = vld [vmem:[%s2 + $0x108] sm:$0xff]
      %v337 = vld [vmem:[%s2 + $0x110] sm:$0xff]
      %v338 = vld [vmem:[%s2 + $0x118] sm:$0xff]
      %v339 = vld [vmem:[%s2 + $0x120] sm:$0xff]
      %v340 = vld [vmem:[%s2 + $0x128] sm:$0xff]
      %v341 = vld [vmem:[%s2 + $0x130] sm:$0xff]
      %v342 = vld [vmem:[%s2 + $0x138] sm:$0xff]
      %v343 = vld [vmem:[%s2 + $0x140] sm:$0xff]
      %v344 = vld [vmem:[%s2 + $0x148] sm:$0xff]
      %v345 = vld [vmem:[%s2 + $0x150] sm:$0xff]
      %v346 = vld [vmem:[%s2 + $0x158] sm:$0xff]
      %v347 = vld [vmem:[%s2 + $0x160] sm:$0xff]
      %v348 = vld [vmem:[%s2 + $0x168] sm:$0xff]
      %v349 = vld [vmem:[%s2 + $0x170] sm:$0xff]
      %v350 = vld [vmem:[%s2 + $0x178] sm:$0xff]
      %v351 = vld [vmem:[%s2 + $0x180] sm:$0xff]
      %v352 = vld [vmem:[%s2 + $0x188] sm:$0xff]
      %v353 = vld [vmem:[%s2 + $0x190] sm:$0xff]
      %v354 = vld [vmem:[%s2 + $0x198] sm:$0xff]
      %v355 = vld [vmem:[%s2 + $0x1a0] sm:$0xff]
      %v356 = vld [vmem:[%s2 + $0x1a8] sm:$0xff]
      %v357 = vld [vmem:[%s2 + $0x1b0] sm:$0xff]
      %v358 = vld [vmem:[%s2 + $0x1b8] sm:$0xff]
      %v359 = vld [vmem:[%s2 + $0x1c0] sm:$0xff]
      %v360 = vld [vmem:[%s2 + $0x1c8] sm:$0xff]
      %v361 = vld [vmem:[%s2 + $0x1d0] sm:$0xff]
      %v362 = vld [vmem:[%s2 + $0x1d8] sm:$0xff]
      %v363 = vld [vmem:[%s2 + $0x1e0] sm:$0xff]
      %v364 = vld [vmem:[%s2 + $0x1e8] sm:$0xff]
      %v365 = vld [vmem:[%s2 + $0x1f0] sm:$0xff]
      %v366 = vld [vmem:[%s2 + $0x1f8] sm:$0xff]
      %v367 = vld [vmem:[%s2 + $0x200] sm:$0xff]
      %v368 = vld [vmem:[%s2 + $0x208] sm:$0xff]
      %v369 = vld [vmem:[%s2 + $0x210] sm:$0xff]
      %v370 = vld [vmem:[%s2 + $0x218] sm:$0xff]
      %v371 = vld [vmem:[%s2 + $0x220] sm:$0xff]
      %v372 = vld [vmem:[%s2 + $0x228] sm:$0xff]
      %v373 = vld [vmem:[%s2 + $0x230] sm:$0xff]
      %v374 = vld [vmem:[%s2 + $0x238] sm:$0xff]
      %v375 = vld [vmem:[%s2 + $0x240] sm:$0xff]
      %v376 = vld [vmem:[%s2 + $0x248] sm:$0xff]
      %v377 = vld [vmem:[%s2 + $0x250] sm:$0xff]
      %v378 = vld [vmem:[%s2 + $0x258] sm:$0xff]
      %v379 = vld [vmem:[%s2 + $0x260] sm:$0xff]
      %v380 = vld [vmem:[%s2 + $0x268] sm:$0xff]
      %v381 = vld [vmem:[%s2 + $0x270] sm:$0xff]
      %v382 = vld [vmem:[%s2 + $0x278] sm:$0xff]
      %v383 = vld [vmem:[%s2 + $0x280] sm:$0xff]
      %v384 = vld [vmem:[%s2 + $0x288] sm:$0xff]
      %v385 = vld [vmem:[%s2 + $0x290] sm:$0xff]
      %v386 = vld [vmem:[%s2 + $0x298] sm:$0xff]
      %v387 = vld [vmem:[%s2 + $0x2a0] sm:$0xff]
      %v388 = vld [vmem:[%s2 + $0x2a8] sm:$0xff]
      %v389 = vld [vmem:[%s2 + $0x2b0] sm:$0xff]
      %v390 = vld [vmem:[%s2 + $0x2b8] sm:$0xff]
      %v391 = vld [vmem:[%s2 + $0x2c0] sm:$0xff]
      %v392 = vld [vmem:[%s2 + $0x2c8] sm:$0xff]
      %v393 = vld [vmem:[%s2 + $0x2d0] sm:$0xff]
      %v394 = vld [vmem:[%s2 + $0x2d8] sm:$0xff]
      %v395 = vld [vmem:[%s2 + $0x2e0] sm:$0xff]
      %v396 = vld [vmem:[%s2 + $0x2e8] sm:$0xff]
      %v397 = vld [vmem:[%s2 + $0x2f0] sm:$0xff]
      %v398 = vld [vmem:[%s2 + $0x2f8] sm:$0xff]
      %399 = vmatprep.subr.mxu0 %v304
      %400 = vmatpush1.msra.mxu0 %v303
      %401 = vmatprep.subr.mxu0 %v306
      %402 = vmatpush1.msra.mxu0 %v305
      %403 = vmatprep.subr.mxu0 %v308
      %404 = vmatpush1.msra.mxu0 %v307
      %405 = vmatprep.subr.mxu0 %v310
      %406 = vmatpush1.msra.mxu0 %v309
      %407 = vmatprep.subr.mxu0 %v312
      %408 = vmatpush1.msra.mxu0 %v311
      %409 = vmatprep.subr.mxu0 %v314
      %410 = vmatpush1.msra.mxu0 %v313
      %411 = vmatprep.subr.mxu0 %v316
      %412 = vmatpush1.msra.mxu0 %v315
      %413 = vmatprep.subr.mxu0 %v318
      %414 = vmatpush1.msra.mxu0 %v317
      %415 = vmatprep.subr.mxu0 %v320
      %416 = vmatpush1.msra.mxu0 %v319
      %417 = vmatprep.subr.mxu0 %v322
      %418 = vmatpush1.msra.mxu0 %v321
      %419 = vmatprep.subr.mxu0 %v324
      %420 = vmatpush1.msra.mxu0 %v323
      %421 = vmatprep.subr.mxu0 %v326
      %422 = vmatpush1.msra.mxu0 %v325
      %423 = vmatprep.subr.mxu0 %v328
      %424 = vmatpush1.msra.mxu0 %v327
      %425 = vmatprep.subr.mxu0 %v330
      %426 = vmatpush1.msra.mxu0 %v329
      %427 = vmatprep.subr.mxu0 %v332
      %428 = vmatpush1.msra.mxu0 %v331
      %429 = vmatprep.subr.mxu0 %v334
      %430 = vmatpush1.msra.mxu0 %v333
      %431 = vmatprep.subr.mxu0 %v336
      %432 = vmatpush1.msra.mxu0 %v335
      %433 = vmatprep.subr.mxu0 %v338
      %434 = vmatpush1.msra.mxu0 %v337
      %435 = vmatprep.subr.mxu0 %v340
      %436 = vmatpush1.msra.mxu0 %v339
      %437 = vmatprep.subr.mxu0 %v342
      %438 = vmatpush1.msra.mxu0 %v341
      %439 = vmatprep.subr.mxu0 %v344
      %440 = vmatpush1.msra.mxu0 %v343
      %441 = vmatprep.subr.mxu0 %v346
      %442 = vmatpush1.msra.mxu0 %v345
      %443 = vmatprep.subr.mxu0 %v348
      %444 = vmatpush1.msra.mxu0 %v347
      %445 = vmatprep.subr.mxu0 %v350
      %446 = vmatpush1.msra.mxu0 %v349
      %447 = vmatprep.subr.mxu0 %v352
      %448 = vmatpush1.msra.mxu0 %v351
      %449 = vmatprep.subr.mxu0 %v354
      %450 = vmatpush1.msra.mxu0 %v353
      %451 = vmatprep.subr.mxu0 %v356
      %452 = vmatpush1.msra.mxu0 %v355
      %453 = vmatprep.subr.mxu0 %v358
      %454 = vmatpush1.msra.mxu0 %v357
      %455 = vmatprep.subr.mxu0 %v360
      %456 = vmatpush1.msra.mxu0 %v359
      %457 = vmatprep.subr.mxu0 %v362
      %458 = vmatpush1.msra.mxu0 %v361
      %459 = vmatprep.subr.mxu0 %v364
      %460 = vmatpush1.msra.mxu0 %v363
      %461 = vmatprep.subr.mxu0 %v366
      %462 = vmatpush1.msra.mxu0 %v365
      %463 = vmatprep.mubr.f32.mxu0 %v273
      %464 = vmatmul.mubr.f32.gmra.mrb[0].mxu0 %v264
      %v465 = vpop.f32.mrb[0].mxu0
      %v466 = vadd.f32 0.0, %v465
      %v467 = vpop.f32.mrb[0].mxu0
      %468 = vmatprep.mubr.f32.mxu0 %v275
      %469 = vmatmul.mubr.f32.gmra.mrb[0].mxu0 %v265
      %v470 = vpop.f32.mrb[0].mxu0
      %v471 = vadd.f32 0.0, %v470
      %v472 = vpop.f32.mrb[0].mxu0
      %473 = vmatprep.mubr.f32.mxu0 %v291
      %474 = vmatmul.mubr.f32.gmra.mrb[0].mxu0 %v258
      %v475 = vpop.f32.mrb[0].mxu0
      %v476 = vpop.f32.mrb[0].mxu0
      %v477 = vadd.f32 0.0, %v476
      %478 = vmatprep.mubr.f32.mxu0 %v293
      %479 = vmatmul.mubr.f32.gmra.mrb[0].mxu0 %v259
      %v480 = vpop.f32.mrb[0].mxu0
      %v481 = vpop.f32.mrb[0].mxu0
      %v482 = vadd.f32 0.0, %v481
      %483 = vdwg.mxu0
      %484 = vmatprep.subr.mxu0 %v368
      %485 = vmatpush1.msra.mxu0 %v367
      %486 = vmatprep.subr.mxu0 %v370
      %487 = vmatpush1.msra.mxu0 %v369
      %488 = vmatprep.subr.mxu0 %v372
      %489 = vmatpush1.msra.mxu0 %v371
      %490 = vmatprep.subr.mxu0 %v374
      %491 = vmatpush1.msra.mxu0 %v373
      %492 = vmatprep.subr.mxu0 %v376
      %493 = vmatpush1.msra.mxu0 %v375
      %494 = vmatprep.subr.mxu0 %v378
      %495 = vmatpush1.msra.mxu0 %v377
      %496 = vmatprep.subr.mxu0 %v380
      %497 = vmatpush1.msra.mxu0 %v379
      %498 = vmatprep.subr.mxu0 %v382
      %499 = vmatpush1.msra.mxu0 %v381
      %500 = vmatprep.subr.mxu0 %v384
      %501 = vmatpush1.msra.mxu0 %v383
      %502 = vmatprep.subr.mxu0 %v386
      %503 = vmatpush1.msra.mxu0 %v385
      %504 = vmatprep.subr.mxu0 %v388
      %505 = vmatpush1.msra.mxu0 %v387
      %506 = vmatprep.subr.mxu0 %v390
      %507 = vmatpush1.msra.mxu0 %v389
      %508 = vmatprep.subr.mxu0 %v392
      %509 = vmatpush1.msra.mxu0 %v391
      %510 = vmatprep.subr.mxu0 %v394
      %511 = vmatpush1.msra.mxu0 %v393
      %512 = vmatprep.subr.mxu0 %v396
      %513 = vmatpush1.msra.mxu0 %v395
      %514 = vmatprep.subr.mxu0 %v398
      %515 = vmatpush1.msra.mxu0 %v397
      %516 = vmatprep.subr.mxu0 0.0
      %517 = vmatpush1.msra.mxu0 0.0
      %518 = vmatprep.subr.mxu0 0.0
      %519 = vmatpush1.msra.mxu0 0.0
      %520 = vmatprep.subr.mxu0 0.0
      %521 = vmatpush1.msra.mxu0 0.0
      %522 = vmatprep.subr.mxu0 0.0
      %523 = vmatpush1.msra.mxu0 0.0
      %524 = vmatprep.subr.mxu0 0.0
      %525 = vmatpush1.msra.mxu0 0.0
      %526 = vmatprep.subr.mxu0 0.0
      %527 = vmatpush1.msra.mxu0 0.0
      %528 = vmatprep.subr.mxu0 0.0
      %529 = vmatpush1.msra.mxu0 0.0
      %530 = vmatprep.subr.mxu0 0.0
      %531 = vmatpush1.msra.mxu0 0.0
      %532 = vmatprep.subr.mxu0 0.0
      %533 = vmatpush1.msra.mxu0 0.0
      %534 = vmatprep.subr.mxu0 0.0
      %535 = vmatpush1.msra.mxu0 0.0
      %536 = vmatprep.subr.mxu0 0.0
      %537 = vmatpush1.msra.mxu0 0.0
      %538 = vmatprep.subr.mxu0 0.0
      %539 = vmatpush1.msra.mxu0 0.0
      %540 = vmatprep.subr.mxu0 0.0
      %541 = vmatpush1.msra.mxu0 0.0
      %542 = vmatprep.subr.mxu0 0.0
      %543 = vmatpush1.msra.mxu0 0.0
      %544 = vmatprep.subr.mxu0 0.0
      %545 = vmatpush1.msra.mxu0 0.0
      %546 = vmatprep.subr.mxu0 0.0
      %547 = vmatpush1.msra.mxu0 0.0
      %548 = vmatprep.mubr.f32.mxu0 0.0
      %549 = vmatmul.mubr.f32.gmra.mrb[0].mxu0 %v281
      %v550 = vpop.f32.mrb[0].mxu0
      %v551 = vadd.f32 %v466, %v550
      %v552 = vpop.f32.mrb[0].mxu0
      %553 = vmatprep.mubr.f32.mxu0 0.0
      %554 = vmatmul.mubr.f32.gmra.mrb[0].mxu0 %v283
      %v555 = vpop.f32.mrb[0].mxu0
      %v556 = vadd.f32 %v471, %v555
      %v557 = vpop.f32.mrb[0].mxu0
      %558 = vmatprep.mubr.f32.mxu0 0.0
      %559 = vmatmul.mubr.f32.gmra.mrb[0].mxu0 %v298
      %v560 = vpop.f32.mrb[0].mxu0
      %v561 = vpop.f32.mrb[0].mxu0
      %v562 = vadd.f32 %v477, %v561
      %563 = vmatprep.mubr.f32.mxu0 0.0
      %564 = vmatmul.mubr.f32.gmra.mrb[0].mxu0 %v300
      %v565 = vpop.f32.mrb[0].mxu0
      %v566 = vpop.f32.mrb[0].mxu0
      %v567 = vadd.f32 %v482, %v566
      %568 = vdwg.mxu0
      %vm569 = vcmp.eq.f32.partialorder %v562, 0.0
      %vm570 = vcmp.eq.f32.partialorder %v567, 0.0
      %v571 = vsel %vm569, 1.0, %v562
      %v572 = vsel %vm570, 1.0, %v567
      %v573 = vrcp.pop %v571
      %v574 = vmul.f32 %v551, %v573
      %v575 = vrcp.pop %v572
      %v576 = vmul.f32 %v556, %v575
      %v577 = vld [vmem:[%s3] sm:$0x1]
      %v579 = vlaneseq
      %v580 = vshrl.u32 %v579, 7
      %v581 = vsub.s32 0, %v580
      %v582 = vrot.slane %v577, %v581
      %v584 = vadd.f32 %v574, %v582
      %v585 = vadd.f32 %v576, %v582
      %v586 = vsel %vm569, 0.0, %v584
      %v587 = vsel %vm570, 0.0, %v585
      %v588 = vsel %vm569, 0.0, 1.0
      %v589 = vsel %vm570, 0.0, 1.0
      %590 = vst [vmem:[%s252] sm:$0xff] %v586
      %591 = vst [vmem:[%s252 + $0x8] sm:$0xff] %v587
      %592 = vst [vmem:[%s257] sm:$0xff] %v588
      %593 = vst [vmem:[%s257 + $0x8] sm:$0xff] %v589
      %p594 = scmp.lt.s32.totalorder %s17, 1
      %s595 = scalar_select %p594, %s17, 1
      %s596 = smul.addr %s595, 2
      %s597 = smul.addr %s596, 8
      %s598 = scalar_lea.vmem %s4, %s597
      %p599 = scmp.lt.s32.totalorder %s17, 1
      %s600 = scalar_select %p599, %s17, 1
      %s601 = smul.addr %s600, 2
      %s602 = smul.addr %s601, 8
      %s603 = scalar_lea.vmem %s5, %s602
      // Predicated region
      $region37: #{pconv_block.1} parent=35 // pred_check
        %p604 = pneg %p129
      $region38: #{pconv_block.1} parent=35 // pred_check_branch
        %606 = sbr.rel (%p604) target = $region40
      $region39: #{pconv_block.1} parent=35 // pred_region
        _
      $region40: #{pconv_block.1} parent=35 // pred_fallthru
        _
      // Predicated region
      $region41: #{pconv_block.1} parent=35 // pred_check
        %p607 = pneg %p155
      $region42: #{pconv_block.1} parent=35 // pred_check_branch
        %609 = sbr.rel (%p607) target = $region44
      $region43: #{pconv_block.1} parent=35 // pred_region
        _
      $region44: #{pconv_block.1} parent=35 // pred_fallthru
        _
    $region36: #{pconv_block.1} parent=5 // pred_fallthru
      _
    %p610 = scmp.le.s32.totalorder 2, %s12
    // Predicated region
    $region45: #{pconv_block.1} parent=5 // pred_check
      %p611 = pneg %p610
    $region46: #{pconv_block.1} parent=5 // pred_check_branch
      %613 = sbr.rel (%p611) target = $region48
    $region47: #{pconv_block.1} parent=5 // pred_region
      %s614 = ssub.s32 %s12, 2
      // Predicated region
      $region49: #{pconv_block.1} parent=47 // pred_check
        %p615 = pneg %p135
      $region50: #{pconv_block.1} parent=47 // pred_check_branch
        %617 = sbr.rel (%p615) target = $region52
      $region51: #{pconv_block.1} parent=47 // pred_region
        %p618 = scmp.lt.s32.totalorder %s18, 1
        %s619 = scalar_select %p618, %s18, 1
        %s620 = smul.addr %s619, 2
        %s621 = smul.addr %s620, 8
        %s622 = scalar_lea.vmem %s4, %s621
      $region52: #{pconv_block.1} parent=47 // pred_fallthru
        _
      // Predicated region
      $region53: #{pconv_block.1} parent=47 // pred_check
        %p623 = pneg %p161
      $region54: #{pconv_block.1} parent=47 // pred_check_branch
        %625 = sbr.rel (%p623) target = $region56
      $region55: #{pconv_block.1} parent=47 // pred_region
        %p626 = scmp.lt.s32.totalorder %s18, 1
        %s627 = scalar_select %p626, %s18, 1
        %s628 = smul.addr %s627, 2
        %s629 = smul.addr %s628, 8
        %s630 = scalar_lea.vmem %s5, %s629
      $region56: #{pconv_block.1} parent=47 // pred_fallthru
        _
    $region48: #{pconv_block.1} parent=5 // pred_fallthru
      _
  $region6: #{pconv_block.1} parent=0 // loop_footer
    %s16 = sadd.s32 1, %s12
  $region7: #{pconv_block.1} parent=0 // loop_footer_branch
    %11 = sbr.rel target = $region3
  $region8: #{pconv_block.1} parent=0 // loop_exit
    _

</llo_original>
